<compile_context>
chip_gen: v7x
topology: tpu7x:2x2x1
jax: 0.10.0
libtpu: 0.0.40
codegen_flags: <defaults>
</compile_context>

<pallas_src>
import functools

import jax
import jax.numpy as jnp
from jax.experimental import pallas as pl
from jax.experimental.pallas import tpu as pltpu


# ---------------------------------------------------------------------------
# small helpers
# ---------------------------------------------------------------------------
def _round_up(x, m):
    return (x + m - 1) // m * m


def _pad2d(x, rows, cols):
    """Zero-pad x up to at least (rows, cols); returns x unchanged if already big enough."""
    r, c = x.shape
    pr, pc = max(0, rows - r), max(0, cols - c)
    if pr == 0 and pc == 0:
        return x
    return jnp.pad(x, ((0, pr), (0, pc)))


@functools.lru_cache(maxsize=None)
def _vmem_capacity_bytes():
    """Physical VMEM per core (v5e/v6e: 128 MiB, v7x: 64 MiB). Conservative fallback."""
    try:
        return int(pltpu.get_tpu_info().vmem_capacity_bytes)
    except Exception:
        return 64 * 1024 * 1024


def _vmem_limit_bytes():
    """Scoped-VMEM limit for pallas_call: 3/4 of physical, capped at 96 MiB."""
    return min(int(_vmem_capacity_bytes() * 3 // 4), 96 * 1024 * 1024)


def _decompose_mean_adj(a_mean):
    """Row-normalized mean adjacency -> (binary int8 adjacency, f32 per-row scale).

    For DGL 'mean' aggregation every nonzero in a row equals 1/deg, so
    A_mean @ h == scale * (A_bin @ h) exactly (scale kept in f32, never bf16-rounded).
    """
    nnz = jnp.sum(a_mean != 0, axis=1)
    scale = (jnp.sum(a_mean, axis=1) / jnp.maximum(nnz, 1)).astype(jnp.float32)
    a_bin = (a_mean != 0).astype(jnp.int8)
    return a_bin, scale


# ---------------------------------------------------------------------------
# Scalable per-layer path: fused-weight projection + K-tiled aggregation
# ---------------------------------------------------------------------------
def _project_kernel(h_ref, w_ref, o_ref):
    # p = h @ [W_neigh | W_self]; cast to bf16 in-kernel (h may arrive f32 or bf16).
    o_ref[...] = jnp.dot(h_ref[...].astype(jnp.bfloat16), w_ref[...],
                         preferred_element_type=jnp.float32).astype(o_ref.dtype)


def _aggregate_kernel(a_ref, pn_ref, ps_ref, inv_ref, b_ref, o_ref, acc_ref,
                      *, apply_relu):
    k = pl.program_id(1)

    @pl.when(k == 0)
    def _():
        acc_ref[...] = jnp.zeros_like(acc_ref)

    # One src slab of the binary-adjacency x projected-features product.
    # int8 -> bf16 cast is a free VPU op under a DMA-bound matmul; int8 halves A bytes.
    acc_ref[...] += jnp.dot(a_ref[...].astype(jnp.bfloat16), pn_ref[...],
                            preferred_element_type=jnp.float32)

    @pl.when(k == pl.num_programs(1) - 1)
    def _():
        out = (acc_ref[...] * inv_ref[...]               # f32 1/deg mean scale
               + ps_ref[...].astype(jnp.float32)         # self term (dst rows of p)
               + b_ref[...])
        if apply_relu:
            out = jnp.maximum(out, 0.0)
        o_ref[...] = out.astype(o_ref.dtype)


def _choose_tiles(n_dst, n_src, f_in_pad, f_out_pad, in_bytes, out_bytes, budget):
    """tile = min(cap, round_up(n)); shrink against the VMEM budget if needed."""
    tile_m = min(512, _round_up(n_dst, 32))     # 32: int8 sublane packing
    tile_k = min(2048, _round_up(n_src, 128))   # collapses K grid when src fits

    def agg_bytes(tm, tk):
        return (2 * tm * tk                       # int8 A (double-buffered)
                + 2 * tk * f_out_pad * 2          # p neigh slab (bf16)
                + 2 * tm * f_out_pad * 2          # p self slab (bf16)
                + 2 * tm * 128 * 4                # 1/deg (lane-padded f32)
                + 2 * tm * f_out_pad * out_bytes  # output block
                + tm * f_out_pad * 4              # f32 accumulator
                + 2 * f_out_pad * 4)              # bias

    def proj_bytes(tk):
        return (2 * tk * f_in_pad * in_bytes
                + 2 * f_in_pad * 2 * f_out_pad * 2
                + 2 * tk * 2 * f_out_pad * 2)

    def fp(tm, tk):
        return max(agg_bytes(tm, tk), proj_bytes(tk))

    while fp(tile_m, tile_k) > budget and tile_k > 128:
        tile_k = max(128, _round_up(tile_k // 2, 128))
    while fp(tile_m, tile_k) > budget and tile_m > 32:
        tile_m = max(32, _round_up(tile_m // 2, 32))
    return tile_m, tile_k


def sage_conv_layer_tiled(a_mean, h, w_self, w_neigh, bias, *, apply_relu,
                          out_dtype=jnp.float32):
    """One SAGEConv('mean') layer.

    `h` may carry extra zero-padded rows/columns from the previous layer (they are
    ignored via zero-padded A columns / zero-padded W rows).  Returns a PADDED
    [n_dst_pad, f_out_pad] activation; the caller slices once after the last layer.
    """
    n_dst, n_src = a_mean.shape
    f_in, f_out = w_self.shape
    f_out_pad = _round_up(f_out, 128)
    f_in_pad = _round_up(max(f_in, h.shape[1]), 128)

    vmem_limit = _vmem_limit_bytes()
    budget = int(vmem_limit * 0.75)                    # headroom for compiler scratch
    in_bytes = jnp.dtype(h.dtype).itemsize
    out_bytes = jnp.dtype(out_dtype).itemsize
    tile_m, tile_k = _choose_tiles(n_dst, n_src, f_in_pad, f_out_pad,
                                   in_bytes, out_bytes, budget)

    n_dst_pad = _round_up(n_dst, tile_m)
    n_src_pad = _round_up(n_src, tile_k)
    h_rows = _round_up(max(n_dst_pad, n_src_pad, h.shape[0]), tile_k)

    # Compressed adjacency stream + exact f32 mean scale.
    a_bin, scale = _decompose_mean_adj(a_mean)
    a_p = _pad2d(a_bin, n_dst_pad, n_src_pad)
    inv_p = _pad2d(scale.reshape(n_dst, 1), n_dst_pad, 1)

    # Activations are NOT cast/copied here; the projection kernel casts in-VMEM.
    h_p = _pad2d(h, h_rows, f_in_pad)

    # Fused weight: [W_neigh | W_self] -> 2*f_out_pad wide projection (fills the MXU).
    w_cat = jnp.concatenate(
        [_pad2d(w_neigh.astype(jnp.bfloat16), f_in_pad, f_out_pad),
         _pad2d(w_self.astype(jnp.bfloat16), f_in_pad, f_out_pad)], axis=1)
    b_p = _pad2d(bias.reshape(1, f_out).astype(jnp.float32), 1, f_out_pad)

    # (a) projection: p = h @ [W_neigh | W_self]   (reassociates (A@h)@Wn -> A@(h@Wn))
    p_all = pl.pallas_call(
        _project_kernel,
        out_shape=jax.ShapeDtypeStruct((h_rows, 2 * f_out_pad), jnp.bfloat16),
        grid=(h_rows // tile_k,),
        in_specs=[
            pl.BlockSpec((tile_k, f_in_pad), lambda i: (i, 0)),
            pl.BlockSpec((f_in_pad, 2 * f_out_pad), lambda i: (0, 0)),
        ],
        out_specs=pl.BlockSpec((tile_k, 2 * f_out_pad), lambda i: (i, 0)),
        compiler_params=pltpu.CompilerParams(
            dimension_semantics=("parallel",), vmem_limit_bytes=vmem_limit),
    )(h_p, w_cat)

    # (b) aggregation; reduction over src nodes is the last ("arbitrary") grid axis.
    out_pad = pl.pallas_call(
        functools.partial(_aggregate_kernel, apply_relu=apply_relu),
        out_shape=jax.ShapeDtypeStruct((n_dst_pad, f_out_pad), out_dtype),
        grid=(n_dst_pad // tile_m, n_src_pad // tile_k),
        in_specs=[
            pl.BlockSpec((tile_m, tile_k), lambda i, k: (i, k)),        # A (int8, 0/1)
            pl.BlockSpec((tile_k, f_out_pad), lambda i, k: (k, 0)),     # p: neigh half
            pl.BlockSpec((tile_m, f_out_pad), lambda i, k: (i, 1)),     # p: self half (dst rows)
            pl.BlockSpec((tile_m, 1), lambda i, k: (i, 0)),             # 1/deg (f32)
            pl.BlockSpec((1, f_out_pad), lambda i, k: (0, 0)),          # bias
        ],
        out_specs=pl.BlockSpec((tile_m, f_out_pad), lambda i, k: (i, 0)),
        scratch_shapes=[pltpu.VMEM((tile_m, f_out_pad), jnp.float32)],
        compiler_params=pltpu.CompilerParams(
            dimension_semantics=("parallel", "arbitrary"),
            vmem_limit_bytes=vmem_limit),
    )(a_p, p_all, p_all, inv_p, b_p)

    return out_pad


# ---------------------------------------------------------------------------
# Fully fused path for small sampled mini-batches: all layers in one pallas_call
# ---------------------------------------------------------------------------
def _sage_fused_kernel(*refs, n_layers, n_dst_per_layer, relu_per_layer):
    x_ref = refs[0]
    a_refs = refs[1:1 + n_layers]
    inv_refs = refs[1 + n_layers:1 + 2 * n_layers]
    ws_refs = refs[1 + 2 * n_layers:1 + 3 * n_layers]
    wn_refs = refs[1 + 3 * n_layers:1 + 4 * n_layers]
    b_refs = refs[1 + 4 * n_layers:1 + 5 * n_layers]
    o_ref = refs[1 + 5 * n_layers]

    h = x_ref[...]
    for l in range(n_layers):
        hb = h.astype(jnp.bfloat16)
        h_dst = hb[:n_dst_per_layer[l]]              # dst nodes = leading src rows
        # Reassociated neighbor term: A_bin @ (h @ W_neigh), f32 1/deg post-scale.
        p = jnp.dot(hb, wn_refs[l][...], preferred_element_type=jnp.float32)
        neigh = jnp.dot(a_refs[l][...].astype(jnp.bfloat16), p.astype(jnp.bfloat16),
                        preferred_element_type=jnp.float32) * inv_refs[l][...]
        h = (jnp.dot(h_dst, ws_refs[l][...], preferred_element_type=jnp.float32)
             + neigh + b_refs[l][...])
        if relu_per_layer[l]:
            h = jnp.maximum(h, 0.0)
    o_ref[...] = h.astype(o_ref.dtype)


def sage_forward_fused(blocks, x, params):
    n_layers = len(params)
    a_list, inv_list = [], []
    for a in blocks:
        a_bin, scale = _decompose_mean_adj(a)
        a_list.append(a_bin)
        inv_list.append(scale.reshape(-1, 1))
    ws_list = [ws.astype(jnp.bfloat16) for ws, _, _ in params]
    wn_list = [wn.astype(jnp.bfloat16) for _, wn, _ in params]
    b_list = [b.reshape(1, -1).astype(jnp.float32) for _, _, b in params]

    n_dst_last = blocks[-1].shape[0]
    f_out_last = params[-1][0].shape[1]
    kernel = functools.partial(
        _sage_fused_kernel,
        n_layers=n_layers,
        n_dst_per_layer=tuple(int(a.shape[0]) for a in blocks),
        relu_per_layer=tuple(l != n_layers - 1 for l in range(n_layers)),
    )
    # No grid / no BlockSpecs: every operand lives fully in VMEM for the call.
    return pl.pallas_call(
        kernel,
        out_shape=jax.ShapeDtypeStruct((n_dst_last, f_out_last), jnp.float32),
        compiler_params=pltpu.CompilerParams(vmem_limit_bytes=_vmem_limit_bytes()),
    )(x, *a_list, *inv_list, *ws_list, *wn_list, *b_list)


# ---------------------------------------------------------------------------
# Forward (mirrors SAGE.forward in eval mode)
# ---------------------------------------------------------------------------
def _fused_vmem_bytes(blocks, x, params):
    """Actual byte footprint of the fused path (int8 A, bf16 W, f32 intermediates)."""
    total = x.size * jnp.dtype(x.dtype).itemsize
    for a, (ws, wn, b) in zip(blocks, params):
        n_dst, n_src = a.shape
        f_out = ws.shape[1]
        total += a.size                              # int8 adjacency
        total += n_dst * 4                           # 1/deg f32
        total += (ws.size + wn.size) * 2 + b.size * 4
        total += (n_src + 2 * n_dst) * f_out * 4     # f32 intermediates headroom
    return total


def sage_forward(blocks, x, params, *, force_tiled=False):
    """blocks: list of [N_dst_l, N_src_l] mean-normalized dense adjacencies.
       x:      [N_src_0, in_feats] input features.
       params: list of (W_self, W_neigh, bias) per layer."""
    n_layers = len(params)
    fused_budget = min(_vmem_capacity_bytes() // 4, 32 * 1024 * 1024)
    if not force_tiled and _fused_vmem_bytes(blocks, x, params) <= fused_budget:
        return sage_forward_fused(blocks, x, params)

    h = x
    for l, (a_mean, (w_self, w_neigh, b)) in enumerate(zip(blocks, params)):
        last = (l == n_layers - 1)
        # Activations stay padded (rows + 128-lane feature dim) and bf16 between layers.
        h = sage_conv_layer_tiled(
            a_mean, h, w_self, w_neigh, b,
            apply_relu=not last,
            out_dtype=jnp.float32 if last else jnp.bfloat16)
    return h[:blocks[-1].shape[0], :params[-1][0].shape[1]]


# ---------------------------------------------------------------------------
# Pure-JAX reference and synthetic data
# ---------------------------------------------------------------------------
def reference_forward(blocks, x, params):
    h = x
    n_layers = len(params)
    for l, (a, (ws, wn, b)) in enumerate(zip(blocks, params)):
        h_dst = h[: a.shape[0]]
        h = h_dst @ ws + (a @ h) @ wn + b
        if l != n_layers - 1:
            h = jnp.maximum(h, 0.0)
    return h


def make_mean_block(key, n_dst, n_src):
    """Random bipartite block -> dense row-normalized (mean) adjacency."""
    adj = (jax.random.uniform(key, (n_dst, n_src)) < 0.3).astype(jnp.float32)
    adj = adj.at[jnp.arange(n_dst), jnp.arange(n_dst)].set(1.0)  # >=1 neighbor
    deg = jnp.sum(adj, axis=1, keepdims=True)
    return adj / deg


def make_params(key, feat_dims, scale=0.1):
    params = []
    for l in range(len(feat_dims) - 1):
        k1, k2, k3, key = jax.random.split(key, 4)
        f_in, f_out = feat_dims[l], feat_dims[l + 1]
        params.append((scale * jax.random.normal(k1, (f_in, f_out), jnp.float32),
                       scale * jax.random.normal(k2, (f_in, f_out), jnp.float32),
                       scale * jax.random.normal(k3, (f_out,), jnp.float32)))
    return params


if __name__ == "__main__":
    key = jax.random.PRNGKey(0)
    k_small, k_big = jax.random.split(key)

    # ---- Test 1: small sampled mini-batch (fused single-kernel path) ----
    in_feats, n_hidden, n_classes, n_layers = 32, 32, 16, 3
    node_counts = [64, 32, 16, 8]
    kb, kp, kx = jax.random.split(k_small, 3)
    bkeys = jax.random.split(kb, n_layers)
    blocks = [make_mean_block(bkeys[l], node_counts[l + 1], node_counts[l])
              for l in range(n_layers)]
    feat_dims = [in_feats] + [n_hidden] * (n_layers - 1) + [n_classes]
    params = make_params(kp, feat_dims, scale=0.1)
    x = jax.random.normal(kx, (node_counts[0], in_feats), jnp.float32)

    out_small = jax.block_until_ready(sage_forward(blocks, x, params))
    ref_small = reference_forward(blocks, x, params)
    assert out_small.shape == (node_counts[-1], n_classes), out_small.shape
    assert jnp.allclose(out_small, ref_small, atol=5e-2, rtol=5e-2), (
        float(jnp.max(jnp.abs(out_small - ref_small))))

    # ---- Test 2: larger graph (tiled projection + aggregation path) ----
    in2, hid2, cls2, layers2 = 128, 128, 32, 2
    counts2 = [768, 384, 128]
    kb2, kp2, kx2 = jax.random.split(k_big, 3)
    bkeys2 = jax.random.split(kb2, layers2)
    blocks2 = [make_mean_block(bkeys2[l], counts2[l + 1], counts2[l])
               for l in range(layers2)]
    feat_dims2 = [in2] + [hid2] * (layers2 - 1) + [cls2]
    params2 = make_params(kp2, feat_dims2, scale=0.05)
    x2 = jax.random.normal(kx2, (counts2[0], in2), jnp.float32)

    out_big = jax.block_until_ready(
        sage_forward(blocks2, x2, params2, force_tiled=True))
    ref_big = reference_forward(blocks2, x2, params2)
    assert out_big.shape == (counts2[-1], cls2), out_big.shape
    assert jnp.allclose(out_big, ref_big, atol=5e-2, rtol=5e-2), (
        float(jnp.max(jnp.abs(out_big - ref_big))))

    print("KERNEL_OK")
</pallas_src>

<mosaic_0001>
module attributes {stable_mosaic.version = 11 : i64} {
  func.func @_sage_fused_kernel(%arg0: memref<64x32xf32, #tpu.memory_space<vmem>>, %arg1: memref<32x64xi8, #tpu.memory_space<vmem>>, %arg2: memref<16x32xi8, #tpu.memory_space<vmem>>, %arg3: memref<8x16xi8, #tpu.memory_space<vmem>>, %arg4: memref<32x1xf32, #tpu.memory_space<vmem>>, %arg5: memref<16x1xf32, #tpu.memory_space<vmem>>, %arg6: memref<8x1xf32, #tpu.memory_space<vmem>>, %arg7: memref<32x32xbf16, #tpu.memory_space<vmem>>, %arg8: memref<32x32xbf16, #tpu.memory_space<vmem>>, %arg9: memref<32x16xbf16, #tpu.memory_space<vmem>>, %arg10: memref<32x32xbf16, #tpu.memory_space<vmem>>, %arg11: memref<32x32xbf16, #tpu.memory_space<vmem>>, %arg12: memref<32x16xbf16, #tpu.memory_space<vmem>>, %arg13: memref<1x32xf32, #tpu.memory_space<vmem>>, %arg14: memref<1x32xf32, #tpu.memory_space<vmem>>, %arg15: memref<1x16xf32, #tpu.memory_space<vmem>>, %arg16: memref<8x16xf32, #tpu.memory_space<vmem>>) attributes {dimension_semantics = [], scalar_prefetch = 0 : i64, scratch_operands = 0 : i64, tpu.core_type = #tpu.core_type<tc>} {
    %c0 = arith.constant 0 : index
    %c0_0 = arith.constant 0 : index
    %0 = vector.load %arg0[%c0, %c0_0] : memref<64x32xf32, #tpu.memory_space<vmem>>, vector<64x32xf32>
    %1 = arith.truncf %0 : vector<64x32xf32> to vector<64x32xbf16>
    %2 = vector.extract_strided_slice %1 {offsets = [0, 0], sizes = [32, 32], strides = [1, 1]} : vector<64x32xbf16> to vector<32x32xbf16>
    %c0_1 = arith.constant 0 : index
    %c0_2 = arith.constant 0 : index
    %3 = vector.load %arg10[%c0_1, %c0_2] : memref<32x32xbf16, #tpu.memory_space<vmem>>, vector<32x32xbf16>
    %cst = arith.constant dense<0.000000e+00> : vector<64x32xf32>
    %4 = tpu.matmul %1, %3, %cst {dimension_numbers = #tpu.dot_dimension_numbers<[1], [0], [0], [1], [0, 0, 1, 1], [], []>} : vector<64x32xbf16>, vector<32x32xbf16>, vector<64x32xf32> -> vector<64x32xf32>
    %c0_3 = arith.constant 0 : index
    %c0_4 = arith.constant 0 : index
    %5 = vector.load %arg1[%c0_3, %c0_4] : memref<32x64xi8, #tpu.memory_space<vmem>>, vector<32x64xi8>
    %6 = arith.sitofp %5 : vector<32x64xi8> to vector<32x64xbf16>
    %7 = arith.truncf %4 : vector<64x32xf32> to vector<64x32xbf16>
    %cst_5 = arith.constant dense<0.000000e+00> : vector<32x32xf32>
    %8 = tpu.matmul %6, %7, %cst_5 {dimension_numbers = #tpu.dot_dimension_numbers<[1], [0], [0], [1], [0, 0, 1, 1], [], []>} : vector<32x64xbf16>, vector<64x32xbf16>, vector<32x32xf32> -> vector<32x32xf32>
    %c0_6 = arith.constant 0 : index
    %c0_7 = arith.constant 0 : index
    %9 = vector.load %arg4[%c0_6, %c0_7] : memref<32x1xf32, #tpu.memory_space<vmem>>, vector<32x1xf32>
    %10 = vector.broadcast %9 : vector<32x1xf32> to vector<32x32xf32>
    %11 = arith.mulf %8, %10 : vector<32x32xf32>
    %c0_8 = arith.constant 0 : index
    %c0_9 = arith.constant 0 : index
    %12 = vector.load %arg7[%c0_8, %c0_9] : memref<32x32xbf16, #tpu.memory_space<vmem>>, vector<32x32xbf16>
    %cst_10 = arith.constant dense<0.000000e+00> : vector<32x32xf32>
    %13 = tpu.matmul %2, %12, %cst_10 {dimension_numbers = #tpu.dot_dimension_numbers<[1], [0], [0], [1], [0, 0, 1, 1], [], []>} : vector<32x32xbf16>, vector<32x32xbf16>, vector<32x32xf32> -> vector<32x32xf32>
    %14 = arith.addf %13, %11 : vector<32x32xf32>
    %c0_11 = arith.constant 0 : index
    %c0_12 = arith.constant 0 : index
    %15 = vector.load %arg13[%c0_11, %c0_12] : memref<1x32xf32, #tpu.memory_space<vmem>>, vector<1x32xf32>
    %16 = vector.broadcast %15 : vector<1x32xf32> to vector<32x32xf32>
    %17 = arith.addf %14, %16 : vector<32x32xf32>
    %cst_13 = arith.constant 0.000000e+00 : f32
    %18 = vector.broadcast %cst_13 : f32 to vector<32x32xf32>
    %19 = arith.maximumf %17, %18 : vector<32x32xf32>
    %20 = arith.truncf %19 : vector<32x32xf32> to vector<32x32xbf16>
    %21 = vector.extract_strided_slice %20 {offsets = [0, 0], sizes = [16, 32], strides = [1, 1]} : vector<32x32xbf16> to vector<16x32xbf16>
    %c0_14 = arith.constant 0 : index
    %c0_15 = arith.constant 0 : index
    %22 = vector.load %arg11[%c0_14, %c0_15] : memref<32x32xbf16, #tpu.memory_space<vmem>>, vector<32x32xbf16>
    %cst_16 = arith.constant dense<0.000000e+00> : vector<32x32xf32>
    %23 = tpu.matmul %20, %22, %cst_16 {dimension_numbers = #tpu.dot_dimension_numbers<[1], [0], [0], [1], [0, 0, 1, 1], [], []>} : vector<32x32xbf16>, vector<32x32xbf16>, vector<32x32xf32> -> vector<32x32xf32>
    %c0_17 = arith.constant 0 : index
    %c0_18 = arith.constant 0 : index
    %24 = vector.load %arg2[%c0_17, %c0_18] : memref<16x32xi8, #tpu.memory_space<vmem>>, vector<16x32xi8>
    %25 = arith.sitofp %24 : vector<16x32xi8> to vector<16x32xbf16>
    %26 = arith.truncf %23 : vector<32x32xf32> to vector<32x32xbf16>
    %cst_19 = arith.constant dense<0.000000e+00> : vector<16x32xf32>
    %27 = tpu.matmul %25, %26, %cst_19 {dimension_numbers = #tpu.dot_dimension_numbers<[1], [0], [0], [1], [0, 0, 1, 1], [], []>} : vector<16x32xbf16>, vector<32x32xbf16>, vector<16x32xf32> -> vector<16x32xf32>
    %c0_20 = arith.constant 0 : index
    %c0_21 = arith.constant 0 : index
    %28 = vector.load %arg5[%c0_20, %c0_21] : memref<16x1xf32, #tpu.memory_space<vmem>>, vector<16x1xf32>
    %29 = vector.broadcast %28 : vector<16x1xf32> to vector<16x32xf32>
    %30 = arith.mulf %27, %29 : vector<16x32xf32>
    %c0_22 = arith.constant 0 : index
    %c0_23 = arith.constant 0 : index
    %31 = vector.load %arg8[%c0_22, %c0_23] : memref<32x32xbf16, #tpu.memory_space<vmem>>, vector<32x32xbf16>
    %cst_24 = arith.constant dense<0.000000e+00> : vector<16x32xf32>
    %32 = tpu.matmul %21, %31, %cst_24 {dimension_numbers = #tpu.dot_dimension_numbers<[1], [0], [0], [1], [0, 0, 1, 1], [], []>} : vector<16x32xbf16>, vector<32x32xbf16>, vector<16x32xf32> -> vector<16x32xf32>
    %33 = arith.addf %32, %30 : vector<16x32xf32>
    %c0_25 = arith.constant 0 : index
    %c0_26 = arith.constant 0 : index
    %34 = vector.load %arg14[%c0_25, %c0_26] : memref<1x32xf32, #tpu.memory_space<vmem>>, vector<1x32xf32>
    %35 = vector.broadcast %34 : vector<1x32xf32> to vector<16x32xf32>
    %36 = arith.addf %33, %35 : vector<16x32xf32>
    %cst_27 = arith.constant 0.000000e+00 : f32
    %37 = vector.broadcast %cst_27 : f32 to vector<16x32xf32>
    %38 = arith.maximumf %36, %37 : vector<16x32xf32>
    %39 = arith.truncf %38 : vector<16x32xf32> to vector<16x32xbf16>
    %40 = vector.extract_strided_slice %39 {offsets = [0, 0], sizes = [8, 32], strides = [1, 1]} : vector<16x32xbf16> to vector<8x32xbf16>
    %c0_28 = arith.constant 0 : index
    %c0_29 = arith.constant 0 : index
    %41 = vector.load %arg12[%c0_28, %c0_29] : memref<32x16xbf16, #tpu.memory_space<vmem>>, vector<32x16xbf16>
    %cst_30 = arith.constant dense<0.000000e+00> : vector<16x16xf32>
    %42 = tpu.matmul %39, %41, %cst_30 {dimension_numbers = #tpu.dot_dimension_numbers<[1], [0], [0], [1], [0, 0, 1, 1], [], []>} : vector<16x32xbf16>, vector<32x16xbf16>, vector<16x16xf32> -> vector<16x16xf32>
    %c0_31 = arith.constant 0 : index
    %c0_32 = arith.constant 0 : index
    %43 = vector.load %arg3[%c0_31, %c0_32] : memref<8x16xi8, #tpu.memory_space<vmem>>, vector<8x16xi8>
    %44 = arith.sitofp %43 : vector<8x16xi8> to vector<8x16xbf16>
    %45 = arith.truncf %42 : vector<16x16xf32> to vector<16x16xbf16>
    %cst_33 = arith.constant dense<0.000000e+00> : vector<8x16xf32>
    %46 = tpu.matmul %44, %45, %cst_33 {dimension_numbers = #tpu.dot_dimension_numbers<[1], [0], [0], [1], [0, 0, 1, 1], [], []>} : vector<8x16xbf16>, vector<16x16xbf16>, vector<8x16xf32> -> vector<8x16xf32>
    %c0_34 = arith.constant 0 : index
    %c0_35 = arith.constant 0 : index
    %47 = vector.load %arg6[%c0_34, %c0_35] : memref<8x1xf32, #tpu.memory_space<vmem>>, vector<8x1xf32>
    %48 = vector.broadcast %47 : vector<8x1xf32> to vector<8x16xf32>
    %49 = arith.mulf %46, %48 : vector<8x16xf32>
    %c0_36 = arith.constant 0 : index
    %c0_37 = arith.constant 0 : index
    %50 = vector.load %arg9[%c0_36, %c0_37] : memref<32x16xbf16, #tpu.memory_space<vmem>>, vector<32x16xbf16>
    %cst_38 = arith.constant dense<0.000000e+00> : vector<8x16xf32>
    %51 = tpu.matmul %40, %50, %cst_38 {dimension_numbers = #tpu.dot_dimension_numbers<[1], [0], [0], [1], [0, 0, 1, 1], [], []>} : vector<8x32xbf16>, vector<32x16xbf16>, vector<8x16xf32> -> vector<8x16xf32>
    %52 = arith.addf %51, %49 : vector<8x16xf32>
    %c0_39 = arith.constant 0 : index
    %c0_40 = arith.constant 0 : index
    %53 = vector.load %arg15[%c0_39, %c0_40] : memref<1x16xf32, #tpu.memory_space<vmem>>, vector<1x16xf32>
    %54 = vector.broadcast %53 : vector<1x16xf32> to vector<8x16xf32>
    %55 = arith.addf %52, %54 : vector<8x16xf32>
    %c0_41 = arith.constant 0 : index
    %c0_42 = arith.constant 0 : index
    %56 = vector.load %arg16[%c0_41, %c0_42] : memref<8x16xf32, #tpu.memory_space<vmem>>, vector<8x16xf32>
    tpu.vector_store %arg16[%c0_41, %c0_42], %55 {strides = array<i32>} : memref<8x16xf32, #tpu.memory_space<vmem>>, vector<8x16xf32>,
    return
  }
}

</mosaic_0001>

<llo_original>
// kernel: tpu_custom_call.1
$region0: #{tpu_custom_call.1}
  #allocation0 [shape = 'u32[]', space=smem, size = 0x4, offset = 0x4, fixed_abs, tag = 'smem constant byte address 0x4 - core index']
  #allocation1 [shape = 'u32[144,128]{1,0:T(1,128)}', space=vmem, size = 0x12000, scoped, tag = 'internal scratch']
  %s0 = inlined_call_operand.vmem [shape: f32[64,32], index: 0, kind: input, shape index: {}]
  %s1 = inlined_call_operand.vmem [shape: s8[32,64], index: 1, kind: input, shape index: {}]
  %s2 = inlined_call_operand.vmem [shape: s8[16,32], index: 2, kind: input, shape index: {}]
  %s3 = inlined_call_operand.vmem [shape: s8[8,16], index: 3, kind: input, shape index: {}]
  %s4 = inlined_call_operand.vmem [shape: f32[32,1], index: 4, kind: input, shape index: {}]
  %s5 = inlined_call_operand.vmem [shape: f32[16,1], index: 5, kind: input, shape index: {}]
  %s6 = inlined_call_operand.vmem [shape: f32[8,1], index: 6, kind: input, shape index: {}]
  %s7 = inlined_call_operand.vmem [shape: bf16[32,32], index: 7, kind: input, shape index: {}]
  %s8 = inlined_call_operand.vmem [shape: bf16[32,32], index: 8, kind: input, shape index: {}]
  %s9 = inlined_call_operand.vmem [shape: bf16[32,16], index: 9, kind: input, shape index: {}]
  %s10 = inlined_call_operand.vmem [shape: bf16[32,32], index: 10, kind: input, shape index: {}]
  %s11 = inlined_call_operand.vmem [shape: bf16[32,32], index: 11, kind: input, shape index: {}]
  %s12 = inlined_call_operand.vmem [shape: bf16[32,16], index: 12, kind: input, shape index: {}]
  %s13 = inlined_call_operand.vmem [shape: f32[1,32], index: 13, kind: input, shape index: {}]
  %s14 = inlined_call_operand.vmem [shape: f32[1,32], index: 14, kind: input, shape index: {}]
  %s15 = inlined_call_operand.vmem [shape: f32[1,16], index: 15, kind: input, shape index: {}]
  %s16 = inlined_call_operand.hbm [shape: f32[8,16], index: 16, kind: output, shape index: {}]
  %s17 = sld [smem:[#allocation0]]
  $region74: #{tpu_custom_call.1} parent=0
    _
  %s19 = ssub.s32 1, %s17
  %s20 = scalar_select 0, %s19, %s17
  $region1: #{tpu_custom_call.1} parent=0
    #allocation2 [shape = 'u8[4096]{0}', space=vmem, size = 0x1000, scoped, tag = 'output window, operand 0, single buffered']
    #allocation3 [shape = 's32[1]{0}', space=sflag, size = 0x4, scoped, tag = 'scoped memory for tpu_custom_call.1']
    %21 = vsyncpa [#allocation3], 0
    // Predicated region
    $region2: #{tpu_custom_call.1} parent=1 // pred_check
      _
    $region3: #{tpu_custom_call.1} parent=1 // pred_check_branch
      %23 = sbr.rel (0) target = $region5
    $region4: #{tpu_custom_call.1} parent=1 // pred_region
      _
    $region5: #{tpu_custom_call.1} parent=1 // pred_fallthru
      _
    // Predicated region
    $region6: #{tpu_custom_call.1} parent=1 // pred_check
      _
    $region7: #{tpu_custom_call.1} parent=1 // pred_check_branch
      %25 = sbr.rel (0) target = $region9
    $region8: #{tpu_custom_call.1} parent=1 // pred_region
      _
    $region9: #{tpu_custom_call.1} parent=1 // pred_fallthru
      _
    // Predicated region
    $region10: #{tpu_custom_call.1} parent=1 // pred_check
      _
    $region11: #{tpu_custom_call.1} parent=1 // pred_check_branch
      %27 = sbr.rel (0) target = $region13
    $region12: #{tpu_custom_call.1} parent=1 // pred_region
      _
    $region13: #{tpu_custom_call.1} parent=1 // pred_fallthru
      _
    // Predicated region
    $region14: #{tpu_custom_call.1} parent=1 // pred_check
      _
    $region15: #{tpu_custom_call.1} parent=1 // pred_check_branch
      %29 = sbr.rel (0) target = $region17
    $region16: #{tpu_custom_call.1} parent=1 // pred_region
      _
    $region17: #{tpu_custom_call.1} parent=1 // pred_fallthru
      _
    // Predicated region
    $region18: #{tpu_custom_call.1} parent=1 // pred_check
      _
    $region19: #{tpu_custom_call.1} parent=1 // pred_check_branch
      %31 = sbr.rel (0) target = $region21
    $region20: #{tpu_custom_call.1} parent=1 // pred_region
      _
    $region21: #{tpu_custom_call.1} parent=1 // pred_fallthru
      _
    // Predicated region
    $region22: #{tpu_custom_call.1} parent=1 // pred_check
      _
    $region23: #{tpu_custom_call.1} parent=1 // pred_check_branch
      %33 = sbr.rel (0) target = $region25
    $region24: #{tpu_custom_call.1} parent=1 // pred_region
      _
    $region25: #{tpu_custom_call.1} parent=1 // pred_fallthru
      _
    // Predicated region
    $region26: #{tpu_custom_call.1} parent=1 // pred_check
      _
    $region27: #{tpu_custom_call.1} parent=1 // pred_check_branch
      %35 = sbr.rel (0) target = $region29
    $region28: #{tpu_custom_call.1} parent=1 // pred_region
      _
    $region29: #{tpu_custom_call.1} parent=1 // pred_fallthru
      _
    // Predicated region
    $region30: #{tpu_custom_call.1} parent=1 // pred_check
      _
    $region31: #{tpu_custom_call.1} parent=1 // pred_check_branch
      %37 = sbr.rel (0) target = $region33
    $region32: #{tpu_custom_call.1} parent=1 // pred_region
      _
    $region33: #{tpu_custom_call.1} parent=1 // pred_fallthru
      _
    // Predicated region
    $region34: #{tpu_custom_call.1} parent=1 // pred_check
      _
    $region35: #{tpu_custom_call.1} parent=1 // pred_check_branch
      %39 = sbr.rel (0) target = $region37
    $region36: #{tpu_custom_call.1} parent=1 // pred_region
      _
    $region37: #{tpu_custom_call.1} parent=1 // pred_fallthru
      _
    // Predicated region
    $region38: #{tpu_custom_call.1} parent=1 // pred_check
      _
    $region39: #{tpu_custom_call.1} parent=1 // pred_check_branch
      %41 = sbr.rel (0) target = $region41
    $region40: #{tpu_custom_call.1} parent=1 // pred_region
      _
    $region41: #{tpu_custom_call.1} parent=1 // pred_fallthru
      _
    // Predicated region
    $region42: #{tpu_custom_call.1} parent=1 // pred_check
      _
    $region43: #{tpu_custom_call.1} parent=1 // pred_check_branch
      %43 = sbr.rel (0) target = $region45
    $region44: #{tpu_custom_call.1} parent=1 // pred_region
      _
    $region45: #{tpu_custom_call.1} parent=1 // pred_fallthru
      _
    // Predicated region
    $region46: #{tpu_custom_call.1} parent=1 // pred_check
      _
    $region47: #{tpu_custom_call.1} parent=1 // pred_check_branch
      %45 = sbr.rel (0) target = $region49
    $region48: #{tpu_custom_call.1} parent=1 // pred_region
      _
    $region49: #{tpu_custom_call.1} parent=1 // pred_fallthru
      _
    // Predicated region
    $region50: #{tpu_custom_call.1} parent=1 // pred_check
      _
    $region51: #{tpu_custom_call.1} parent=1 // pred_check_branch
      %47 = sbr.rel (0) target = $region53
    $region52: #{tpu_custom_call.1} parent=1 // pred_region
      _
    $region53: #{tpu_custom_call.1} parent=1 // pred_fallthru
      _
    // Predicated region
    $region54: #{tpu_custom_call.1} parent=1 // pred_check
      _
    $region55: #{tpu_custom_call.1} parent=1 // pred_check_branch
      %49 = sbr.rel (0) target = $region57
    $region56: #{tpu_custom_call.1} parent=1 // pred_region
      _
    $region57: #{tpu_custom_call.1} parent=1 // pred_fallthru
      _
    // Predicated region
    $region58: #{tpu_custom_call.1} parent=1 // pred_check
      _
    $region59: #{tpu_custom_call.1} parent=1 // pred_check_branch
      %51 = sbr.rel (0) target = $region61
    $region60: #{tpu_custom_call.1} parent=1 // pred_region
      _
    $region61: #{tpu_custom_call.1} parent=1 // pred_fallthru
      _
    // Predicated region
    $region62: #{tpu_custom_call.1} parent=1 // pred_check
      _
    $region63: #{tpu_custom_call.1} parent=1 // pred_check_branch
      %53 = sbr.rel (0) target = $region65
    $region64: #{tpu_custom_call.1} parent=1 // pred_region
      _
    $region65: #{tpu_custom_call.1} parent=1 // pred_fallthru
      _
    %v55 = vld [vmem:[%s0] sm:$0xff]
    %v56 = vld [vmem:[%s0 + $0x8] sm:$0xff]
    %v57 = vld [vmem:[%s0 + $0x10] sm:$0xff]
    %v58 = vld [vmem:[%s0 + $0x18] sm:$0xff]
    %v59 = vld [vmem:[%s0 + $0x20] sm:$0xff]
    %v60 = vld [vmem:[%s0 + $0x28] sm:$0xff]
    %v61 = vld [vmem:[%s0 + $0x30] sm:$0xff]
    %v62 = vld [vmem:[%s0 + $0x38] sm:$0xff]
    %v63 = vpack.c.bf16 %v56, %v55
    %v64 = vpack.c.bf16 %v58, %v57
    %v65 = vpack.c.bf16 %v60, %v59
    %v66 = vpack.c.bf16 %v62, %v61
    %v67 = vld [vmem:[%s10] sm:$0xf]
    %v68 = vld [vmem:[%s10 + $0x4] sm:$0xf]
    %v69 = vld [vmem:[%s10 + $0x8] sm:$0xf]
    %v70 = vld [vmem:[%s10 + $0xc] sm:$0xf]
    %v75 = vunpack.c.l.b16 %v67
    %v76 = vunpack.c.l.b16 %v68
    %v77 = vunpack.c.l.b16 %v69
    %v78 = vunpack.c.l.b16 %v70
    %v79 = vpack.c.b16 %v76, %v75
    %v80 = vpack.c.b16 %v78, %v77
    %vm83 = vcmask 261120
    %v85 = vsel %vm83, %v63, 0
    %v88 = vsel %vm83, %v64, 0
    %v91 = vsel %vm83, %v65, 0
    %v94 = vsel %vm83, %v66, 0
    %96 = vmatprep.subr.bf16.mxu0 0
    %97 = vmatpush1.bf16.msra.mxu0 %v79
    %98 = vmatprep.subr.bf16.mxu0 0
    %99 = vmatpush1.bf16.msra.mxu0 %v80
    %100 = vmatprep.subr.bf16.mxu0 0
    %101 = vmatpush1.bf16.msra.mxu0 0
    %102 = vmatprep.subr.bf16.mxu0 0
    %103 = vmatpush1.bf16.msra.mxu0 0
    %104 = vmatprep.subr.bf16.mxu0 0
    %105 = vmatpush1.bf16.msra.mxu0 0
    %106 = vmatprep.subr.bf16.mxu0 0
    %107 = vmatpush1.bf16.msra.mxu0 0
    %108 = vmatprep.subr.bf16.mxu0 0
    %109 = vmatpush1.bf16.msra.mxu0 0
    %110 = vmatprep.subr.bf16.mxu0 0
    %111 = vmatpush1.bf16.msra.mxu0 0
    %112 = vmatprep.subr.bf16.mxu0 0
    %113 = vmatpush1.bf16.msra.mxu0 0
    %114 = vmatprep.subr.bf16.mxu0 0
    %115 = vmatpush1.bf16.msra.mxu0 0
    %116 = vmatprep.subr.bf16.mxu0 0
    %117 = vmatpush1.bf16.msra.mxu0 0
    %118 = vmatprep.subr.bf16.mxu0 0
    %119 = vmatpush1.bf16.msra.mxu0 0
    %120 = vmatprep.subr.bf16.mxu0 0
    %121 = vmatpush1.bf16.msra.mxu0 0
    %122 = vmatprep.subr.bf16.mxu0 0
    %123 = vmatpush1.bf16.msra.mxu0 0
    %124 = vmatprep.subr.bf16.mxu0 0
    %125 = vmatpush1.bf16.msra.mxu0 0
    %126 = vmatprep.subr.bf16.mxu0 0
    %127 = vmatpush1.bf16.msra.mxu0 0
    %128 = vmatprep.mubr.bf16.mxu0 0
    %129 = vmatmul.mubr.bf16.gmra.mrb[0].mxu0 %v85
    %v130 = vpop.f32.mrb[0].mxu0
    %v131 = vadd.f32 0.0, %v130
    %v132 = vpop.f32.mrb[0].mxu0
    %v133 = vpop.f32.mrb[0].mxu0
    %v134 = vadd.f32 0.0, %v133
    %v135 = vpop.f32.mrb[0].mxu0
    %136 = vmatprep.mubr.bf16.mxu0 0
    %137 = vmatmul.mubr.bf16.gmra.mrb[0].mxu0 %v88
    %v138 = vpop.f32.mrb[0].mxu0
    %v139 = vadd.f32 0.0, %v138
    %v140 = vpop.f32.mrb[0].mxu0
    %v141 = vpop.f32.mrb[0].mxu0
    %v142 = vadd.f32 0.0, %v141
    %v143 = vpop.f32.mrb[0].mxu0
    %144 = vmatprep.mubr.bf16.mxu0 0
    %145 = vmatmul.mubr.bf16.gmra.mrb[0].mxu0 %v91
    %v146 = vpop.f32.mrb[0].mxu0
    %v147 = vadd.f32 0.0, %v146
    %v148 = vpop.f32.mrb[0].mxu0
    %v149 = vpop.f32.mrb[0].mxu0
    %v150 = vadd.f32 0.0, %v149
    %v151 = vpop.f32.mrb[0].mxu0
    %152 = vmatprep.mubr.bf16.mxu0 0
    %153 = vmatmul.mubr.bf16.gmra.mrb[0].mxu0 %v94
    %v154 = vpop.f32.mrb[0].mxu0
    %v155 = vadd.f32 0.0, %v154
    %v156 = vpop.f32.mrb[0].mxu0
    %v157 = vpop.f32.mrb[0].mxu0
    %v158 = vadd.f32 0.0, %v157
    %v159 = vpop.f32.mrb[0].mxu0
    %160 = vdwg.mxu0
    %v161 = vld [vmem:[%s1] sm:$0xff]
    %v162 = vunpack.c.l.s8.bf16 %v161
    %v163 = vunpack.c.h.s8.bf16 %v161
    %v164 = vpack.c.bf16 %v134, %v131
    %v165 = vpack.c.bf16 %v142, %v139
    %v166 = vpack.c.bf16 %v150, %v147
    %v167 = vpack.c.bf16 %v158, %v155
    %vm168 = vcmask 523264
    %v170 = vsel %vm168, %v162, 0
    %v173 = vsel %vm168, %v163, 0
    %175 = vmatprep.subr.bf16.mxu0 0
    %176 = vmatpush1.bf16.msra.mxu0 %v164
    %177 = vmatprep.subr.bf16.mxu0 0
    %178 = vmatpush1.bf16.msra.mxu0 %v165
    %179 = vmatprep.subr.bf16.mxu0 0
    %180 = vmatpush1.bf16.msra.mxu0 %v166
    %181 = vmatprep.subr.bf16.mxu0 0
    %182 = vmatpush1.bf16.msra.mxu0 %v167
    %183 = vmatprep.subr.bf16.mxu0 0
    %184 = vmatpush1.bf16.msra.mxu0 0
    %185 = vmatprep.subr.bf16.mxu0 0
    %186 = vmatpush1.bf16.msra.mxu0 0
    %187 = vmatprep.subr.bf16.mxu0 0
    %188 = vmatpush1.bf16.msra.mxu0 0
    %189 = vmatprep.subr.bf16.mxu0 0
    %190 = vmatpush1.bf16.msra.mxu0 0
    %191 = vmatprep.subr.bf16.mxu0 0
    %192 = vmatpush1.bf16.msra.mxu0 0
    %193 = vmatprep.subr.bf16.mxu0 0
    %194 = vmatpush1.bf16.msra.mxu0 0
    %195 = vmatprep.subr.bf16.mxu0 0
    %196 = vmatpush1.bf16.msra.mxu0 0
    %197 = vmatprep.subr.bf16.mxu0 0
    %198 = vmatpush1.bf16.msra.mxu0 0
    %199 = vmatprep.subr.bf16.mxu0 0
    %200 = vmatpush1.bf16.msra.mxu0 0
    %201 = vmatprep.subr.bf16.mxu0 0
    %202 = vmatpush1.bf16.msra.mxu0 0
    %203 = vmatprep.subr.bf16.mxu0 0
    %204 = vmatpush1.bf16.msra.mxu0 0
    %205 = vmatprep.subr.bf16.mxu0 0
    %206 = vmatpush1.bf16.msra.mxu0 0
    %207 = vmatprep.mubr.bf16.mxu0 0
    %208 = vmatmul.mubr.bf16.gmra.mrb[0].mxu0 %v170
    %v209 = vpop.f32.mrb[0].mxu0
    %v210 = vadd.f32 0.0, %v209
    %v211 = vpop.f32.mrb[0].mxu0
    %v212 = vpop.f32.mrb[0].mxu0
    %v213 = vadd.f32 0.0, %v212
    %v214 = vpop.f32.mrb[0].mxu0
    %215 = vmatprep.mubr.bf16.mxu0 0
    %216 = vmatmul.mubr.bf16.gmra.mrb[0].mxu0 %v173
    %v217 = vpop.f32.mrb[0].mxu0
    %v218 = vadd.f32 0.0, %v217
    %v219 = vpop.f32.mrb[0].mxu0
    %v220 = vpop.f32.mrb[0].mxu0
    %v221 = vadd.f32 0.0, %v220
    %v222 = vpop.f32.mrb[0].mxu0
    %223 = vdwg.mxu0
    %v224 = vld [vmem:[%s4] sm:$0xff]
    %v225 = vld [vmem:[%s4 + $0x8] sm:$0xff]
    %v226 = vld [vmem:[%s4 + $0x10] sm:$0xff]
    %v227 = vld [vmem:[%s4 + $0x18] sm:$0xff]
    %229 = vset.pattern.permute.xlu0 0
    %230 = vperm.xlu0 %229, %v224
    %v231 = vpop.permute.xlu0 %230
    %234 = vset.pattern.permute.xlu0 0
    %235 = vperm.xlu0 %234, %v225
    %v236 = vpop.permute.xlu0 %235
    %239 = vset.pattern.permute.xlu0 0
    %240 = vperm.xlu0 %239, %v226
    %v241 = vpop.permute.xlu0 %240
    %244 = vset.pattern.permute.xlu0 0
    %245 = vperm.xlu0 %244, %v227
    %v246 = vpop.permute.xlu0 %245
    %v248 = vmul.f32 %v210, %v231
    %v249 = vmul.f32 %v213, %v236
    %v250 = vmul.f32 %v218, %v241
    %v251 = vmul.f32 %v221, %v246
    %v252 = vld [vmem:[%s7] sm:$0xf]
    %v253 = vld [vmem:[%s7 + $0x4] sm:$0xf]
    %v254 = vld [vmem:[%s7 + $0x8] sm:$0xf]
    %v255 = vld [vmem:[%s7 + $0xc] sm:$0xf]
    %v260 = vunpack.c.l.b16 %v252
    %v261 = vunpack.c.l.b16 %v253
    %v262 = vunpack.c.l.b16 %v254
    %v263 = vunpack.c.l.b16 %v255
    %v264 = vpack.c.b16 %v261, %v260
    %v265 = vpack.c.b16 %v263, %v262
    %268 = vmatprep.subr.bf16.mxu0 0
    %269 = vmatpush1.bf16.msra.mxu0 %v264
    %270 = vmatprep.subr.bf16.mxu0 0
    %271 = vmatpush1.bf16.msra.mxu0 %v265
    %272 = vmatprep.subr.bf16.mxu0 0
    %273 = vmatpush1.bf16.msra.mxu0 0
    %274 = vmatprep.subr.bf16.mxu0 0
    %275 = vmatpush1.bf16.msra.mxu0 0
    %276 = vmatprep.subr.bf16.mxu0 0
    %277 = vmatpush1.bf16.msra.mxu0 0
    %278 = vmatprep.subr.bf16.mxu0 0
    %279 = vmatpush1.bf16.msra.mxu0 0
    %280 = vmatprep.subr.bf16.mxu0 0
    %281 = vmatpush1.bf16.msra.mxu0 0
    %282 = vmatprep.subr.bf16.mxu0 0
    %283 = vmatpush1.bf16.msra.mxu0 0
    %284 = vmatprep.subr.bf16.mxu0 0
    %285 = vmatpush1.bf16.msra.mxu0 0
    %286 = vmatprep.subr.bf16.mxu0 0
    %287 = vmatpush1.bf16.msra.mxu0 0
    %288 = vmatprep.subr.bf16.mxu0 0
    %289 = vmatpush1.bf16.msra.mxu0 0
    %290 = vmatprep.subr.bf16.mxu0 0
    %291 = vmatpush1.bf16.msra.mxu0 0
    %292 = vmatprep.subr.bf16.mxu0 0
    %293 = vmatpush1.bf16.msra.mxu0 0
    %294 = vmatprep.subr.bf16.mxu0 0
    %295 = vmatpush1.bf16.msra.mxu0 0
    %296 = vmatprep.subr.bf16.mxu0 0
    %297 = vmatpush1.bf16.msra.mxu0 0
    %298 = vmatprep.subr.bf16.mxu0 0
    %299 = vmatpush1.bf16.msra.mxu0 0
    %300 = vmatprep.mubr.bf16.mxu0 0
    %301 = vmatmul.mubr.bf16.gmra.mrb[0].mxu0 %v85
    %v302 = vpop.f32.mrb[0].mxu0
    %v303 = vadd.f32 %v248, %v302
    %v304 = vpop.f32.mrb[0].mxu0
    %v305 = vpop.f32.mrb[0].mxu0
    %v306 = vadd.f32 %v249, %v305
    %v307 = vpop.f32.mrb[0].mxu0
    %308 = vmatprep.mubr.bf16.mxu0 0
    %309 = vmatmul.mubr.bf16.gmra.mrb[0].mxu0 %v88
    %v310 = vpop.f32.mrb[0].mxu0
    %v311 = vadd.f32 %v250, %v310
    %v312 = vpop.f32.mrb[0].mxu0
    %v313 = vpop.f32.mrb[0].mxu0
    %v314 = vadd.f32 %v251, %v313
    %v315 = vpop.f32.mrb[0].mxu0
    %316 = vdwg.mxu0
    %v317 = vld [vmem:[%s13] sm:$0x1]
    %v319 = vlaneseq
    %v320 = vshrl.u32 %v319, 7
    %v321 = vsub.s32 0, %v320
    %v322 = vrot.slane %v317, %v321
    %v324 = vadd.f32 %v303, %v322
    %v325 = vadd.f32 %v306, %v322
    %v326 = vadd.f32 %v311, %v322
    %v327 = vadd.f32 %v314, %v322
    %v328 = vmax.f32 %v324, 0.0
    %v329 = vmax.f32 %v325, 0.0
    %v330 = vmax.f32 %v326, 0.0
    %v331 = vmax.f32 %v327, 0.0
    %v332 = vpack.c.bf16 %v329, %v328
    %v333 = vpack.c.bf16 %v331, %v330
    %v334 = vld [vmem:[%s11] sm:$0xf]
    %v335 = vld [vmem:[%s11 + $0x4] sm:$0xf]
    %v336 = vld [vmem:[%s11 + $0x8] sm:$0xf]
    %v337 = vld [vmem:[%s11 + $0xc] sm:$0xf]
    %v342 = vunpack.c.l.b16 %v334
    %v343 = vunpack.c.l.b16 %v335
    %v344 = vunpack.c.l.b16 %v336
    %v345 = vunpack.c.l.b16 %v337
    %v346 = vpack.c.b16 %v343, %v342
    %v347 = vpack.c.b16 %v345, %v344
    %v351 = vsel %vm83, %v332, 0
    %v354 = vsel %vm83, %v333, 0
    %356 = vmatprep.subr.bf16.mxu0 0
    %357 = vmatpush1.bf16.msra.mxu0 %v346
    %358 = vmatprep.subr.bf16.mxu0 0
    %359 = vmatpush1.bf16.msra.mxu0 %v347
    %360 = vmatprep.subr.bf16.mxu0 0
    %361 = vmatpush1.bf16.msra.mxu0 0
    %362 = vmatprep.subr.bf16.mxu0 0
    %363 = vmatpush1.bf16.msra.mxu0 0
    %364 = vmatprep.subr.bf16.mxu0 0
    %365 = vmatpush1.bf16.msra.mxu0 0
    %366 = vmatprep.subr.bf16.mxu0 0
    %367 = vmatpush1.bf16.msra.mxu0 0
    %368 = vmatprep.subr.bf16.mxu0 0
    %369 = vmatpush1.bf16.msra.mxu0 0
    %370 = vmatprep.subr.bf16.mxu0 0
    %371 = vmatpush1.bf16.msra.mxu0 0
    %372 = vmatprep.subr.bf16.mxu0 0
    %373 = vmatpush1.bf16.msra.mxu0 0
    %374 = vmatprep.subr.bf16.mxu0 0
    %375 = vmatpush1.bf16.msra.mxu0 0
    %376 = vmatprep.subr.bf16.mxu0 0
    %377 = vmatpush1.bf16.msra.mxu0 0
    %378 = vmatprep.subr.bf16.mxu0 0
    %379 = vmatpush1.bf16.msra.mxu0 0
    %380 = vmatprep.subr.bf16.mxu0 0
    %381 = vmatpush1.bf16.msra.mxu0 0
    %382 = vmatprep.subr.bf16.mxu0 0
    %383 = vmatpush1.bf16.msra.mxu0 0
    %384 = vmatprep.subr.bf16.mxu0 0
    %385 = vmatpush1.bf16.msra.mxu0 0
    %386 = vmatprep.subr.bf16.mxu0 0
    %387 = vmatpush1.bf16.msra.mxu0 0
    %388 = vmatprep.mubr.bf16.mxu0 0
    %389 = vmatmul.mubr.bf16.gmra.mrb[0].mxu0 %v351
    %v390 = vpop.f32.mrb[0].mxu0
    %v391 = vadd.f32 0.0, %v390
    %v392 = vpop.f32.mrb[0].mxu0
    %v393 = vpop.f32.mrb[0].mxu0
    %v394 = vadd.f32 0.0, %v393
    %v395 = vpop.f32.mrb[0].mxu0
    %396 = vmatprep.mubr.bf16.mxu0 0
    %397 = vmatmul.mubr.bf16.gmra.mrb[0].mxu0 %v354
    %v398 = vpop.f32.mrb[0].mxu0
    %v399 = vadd.f32 0.0, %v398
    %v400 = vpop.f32.mrb[0].mxu0
    %v401 = vpop.f32.mrb[0].mxu0
    %v402 = vadd.f32 0.0, %v401
    %v403 = vpop.f32.mrb[0].mxu0
    %404 = vdwg.mxu0
    %v405 = vld [vmem:[%s2] sm:$0x3]
    %v406 = vld [vmem:[%s2 + $0x2] sm:$0x3]
    %v407 = vunpack.c.l.s8.bf16 %v405
    %v408 = vunpack.c.l.s8.bf16 %v406
    %v409 = vpack.c.bf16 %v394, %v391
    %v410 = vpack.c.bf16 %v402, %v399
    %v413 = vunpack.c.l.b16 %v407
    %v414 = vunpack.c.l.b16 %v408
    %v415 = vpack.c.b16 %v414, %v413
    %v417 = vsel %vm83, %v415, 0
    %419 = vmatprep.subr.bf16.mxu0 0
    %420 = vmatpush1.bf16.msra.mxu0 %v409
    %421 = vmatprep.subr.bf16.mxu0 0
    %422 = vmatpush1.bf16.msra.mxu0 %v410
    %423 = vmatprep.subr.bf16.mxu0 0
    %424 = vmatpush1.bf16.msra.mxu0 0
    %425 = vmatprep.subr.bf16.mxu0 0
    %426 = vmatpush1.bf16.msra.mxu0 0
    %427 = vmatprep.subr.bf16.mxu0 0
    %428 = vmatpush1.bf16.msra.mxu0 0
    %429 = vmatprep.subr.bf16.mxu0 0
    %430 = vmatpush1.bf16.msra.mxu0 0
    %431 = vmatprep.subr.bf16.mxu0 0
    %432 = vmatpush1.bf16.msra.mxu0 0
    %433 = vmatprep.subr.bf16.mxu0 0
    %434 = vmatpush1.bf16.msra.mxu0 0
    %435 = vmatprep.subr.bf16.mxu0 0
    %436 = vmatpush1.bf16.msra.mxu0 0
    %437 = vmatprep.subr.bf16.mxu0 0
    %438 = vmatpush1.bf16.msra.mxu0 0
    %439 = vmatprep.subr.bf16.mxu0 0
    %440 = vmatpush1.bf16.msra.mxu0 0
    %441 = vmatprep.subr.bf16.mxu0 0
    %442 = vmatpush1.bf16.msra.mxu0 0
    %443 = vmatprep.subr.bf16.mxu0 0
    %444 = vmatpush1.bf16.msra.mxu0 0
    %445 = vmatprep.subr.bf16.mxu0 0
    %446 = vmatpush1.bf16.msra.mxu0 0
    %447 = vmatprep.subr.bf16.mxu0 0
    %448 = vmatpush1.bf16.msra.mxu0 0
    %449 = vmatprep.subr.bf16.mxu0 0
    %450 = vmatpush1.bf16.msra.mxu0 0
    %451 = vmatprep.mubr.bf16.mxu0 0
    %452 = vmatmul.mubr.bf16.gmra.mrb[0].mxu0 %v417
    %v453 = vpop.f32.mrb[0].mxu0
    %v454 = vadd.f32 0.0, %v453
    %v455 = vpop.f32.mrb[0].mxu0
    %v456 = vpop.f32.mrb[0].mxu0
    %v457 = vadd.f32 0.0, %v456
    %v458 = vpop.f32.mrb[0].mxu0
    %459 = vdwg.mxu0
    %v460 = vld [vmem:[%s5] sm:$0xff]
    %v461 = vld [vmem:[%s5 + $0x8] sm:$0xff]
    %463 = vset.pattern.permute.xlu0 0
    %464 = vperm.xlu0 %463, %v460
    %v465 = vpop.permute.xlu0 %464
    %468 = vset.pattern.permute.xlu0 0
    %469 = vperm.xlu0 %468, %v461
    %v470 = vpop.permute.xlu0 %469
    %v472 = vmul.f32 %v454, %v465
    %v473 = vmul.f32 %v457, %v470
    %v474 = vld [vmem:[%s8] sm:$0xf]
    %v475 = vld [vmem:[%s8 + $0x4] sm:$0xf]
    %v476 = vld [vmem:[%s8 + $0x8] sm:$0xf]
    %v477 = vld [vmem:[%s8 + $0xc] sm:$0xf]
    %v482 = vunpack.c.l.b16 %v474
    %v483 = vunpack.c.l.b16 %v475
    %v484 = vunpack.c.l.b16 %v476
    %v485 = vunpack.c.l.b16 %v477
    %v486 = vpack.c.b16 %v483, %v482
    %v487 = vpack.c.b16 %v485, %v484
    %490 = vmatprep.subr.bf16.mxu0 0
    %491 = vmatpush1.bf16.msra.mxu0 %v486
    %492 = vmatprep.subr.bf16.mxu0 0
    %493 = vmatpush1.bf16.msra.mxu0 %v487
    %494 = vmatprep.subr.bf16.mxu0 0
    %495 = vmatpush1.bf16.msra.mxu0 0
    %496 = vmatprep.subr.bf16.mxu0 0
    %497 = vmatpush1.bf16.msra.mxu0 0
    %498 = vmatprep.subr.bf16.mxu0 0
    %499 = vmatpush1.bf16.msra.mxu0 0
    %500 = vmatprep.subr.bf16.mxu0 0
    %501 = vmatpush1.bf16.msra.mxu0 0
    %502 = vmatprep.subr.bf16.mxu0 0
    %503 = vmatpush1.bf16.msra.mxu0 0
    %504 = vmatprep.subr.bf16.mxu0 0
    %505 = vmatpush1.bf16.msra.mxu0 0
    %506 = vmatprep.subr.bf16.mxu0 0
    %507 = vmatpush1.bf16.msra.mxu0 0
    %508 = vmatprep.subr.bf16.mxu0 0
    %509 = vmatpush1.bf16.msra.mxu0 0
    %510 = vmatprep.subr.bf16.mxu0 0
    %511 = vmatpush1.bf16.msra.mxu0 0
    %512 = vmatprep.subr.bf16.mxu0 0
    %513 = vmatpush1.bf16.msra.mxu0 0
    %514 = vmatprep.subr.bf16.mxu0 0
    %515 = vmatpush1.bf16.msra.mxu0 0
    %516 = vmatprep.subr.bf16.mxu0 0
    %517 = vmatpush1.bf16.msra.mxu0 0
    %518 = vmatprep.subr.bf16.mxu0 0
    %519 = vmatpush1.bf16.msra.mxu0 0
    %520 = vmatprep.subr.bf16.mxu0 0
    %521 = vmatpush1.bf16.msra.mxu0 0
    %522 = vmatprep.mubr.bf16.mxu0 0
    %523 = vmatmul.mubr.bf16.gmra.mrb[0].mxu0 %v351
    %v524 = vpop.f32.mrb[0].mxu0
    %v525 = vadd.f32 %v472, %v524
    %v526 = vpop.f32.mrb[0].mxu0
    %v527 = vpop.f32.mrb[0].mxu0
    %v528 = vadd.f32 %v473, %v527
    %v529 = vpop.f32.mrb[0].mxu0
    %530 = vdwg.mxu0
    %v531 = vld [vmem:[%s14] sm:$0x1]
    %v533 = vlaneseq
    %v534 = vshrl.u32 %v533, 7
    %v535 = vsub.s32 0, %v534
    %v536 = vrot.slane %v531, %v535
    %v538 = vadd.f32 %v525, %v536
    %v539 = vadd.f32 %v528, %v536
    %v540 = vmax.f32 %v538, 0.0
    %v541 = vmax.f32 %v539, 0.0
    %v542 = vpack.c.bf16 %v541, %v540
    %v543 = vld [vmem:[%s12] sm:$0xf]
    %v544 = vld [vmem:[%s12 + $0x4] sm:$0xf]
    %v545 = vld [vmem:[%s12 + $0x8] sm:$0xf]
    %v546 = vld [vmem:[%s12 + $0xc] sm:$0xf]
    %v551 = vunpack.c.l.b16 %v543
    %v552 = vunpack.c.l.b16 %v544
    %v553 = vunpack.c.l.b16 %v545
    %v554 = vunpack.c.l.b16 %v546
    %v555 = vpack.c.b16 %v552, %v551
    %v556 = vpack.c.b16 %v554, %v553
    %v560 = vsel %vm83, %v542, 0
    %562 = vmatprep.subr.bf16.mxu0 0
    %563 = vmatpush1.bf16.msra.mxu0 %v555
    %564 = vmatprep.subr.bf16.mxu0 0
    %565 = vmatpush1.bf16.msra.mxu0 %v556
    %566 = vmatprep.subr.bf16.mxu0 0
    %567 = vmatpush1.bf16.msra.mxu0 0
    %568 = vmatprep.subr.bf16.mxu0 0
    %569 = vmatpush1.bf16.msra.mxu0 0
    %570 = vmatprep.subr.bf16.mxu0 0
    %571 = vmatpush1.bf16.msra.mxu0 0
    %572 = vmatprep.subr.bf16.mxu0 0
    %573 = vmatpush1.bf16.msra.mxu0 0
    %574 = vmatprep.subr.bf16.mxu0 0
    %575 = vmatpush1.bf16.msra.mxu0 0
    %576 = vmatprep.subr.bf16.mxu0 0
    %577 = vmatpush1.bf16.msra.mxu0 0
    %578 = vmatprep.subr.bf16.mxu0 0
    %579 = vmatpush1.bf16.msra.mxu0 0
    %580 = vmatprep.subr.bf16.mxu0 0
    %581 = vmatpush1.bf16.msra.mxu0 0
    %582 = vmatprep.subr.bf16.mxu0 0
    %583 = vmatpush1.bf16.msra.mxu0 0
    %584 = vmatprep.subr.bf16.mxu0 0
    %585 = vmatpush1.bf16.msra.mxu0 0
    %586 = vmatprep.subr.bf16.mxu0 0
    %587 = vmatpush1.bf16.msra.mxu0 0
    %588 = vmatprep.subr.bf16.mxu0 0
    %589 = vmatpush1.bf16.msra.mxu0 0
    %590 = vmatprep.subr.bf16.mxu0 0
    %591 = vmatpush1.bf16.msra.mxu0 0
    %592 = vmatprep.subr.bf16.mxu0 0
    %593 = vmatpush1.bf16.msra.mxu0 0
    %594 = vmatprep.mubr.bf16.mxu0 0
    %595 = vmatmul.mubr.bf16.gmra.mrb[0].mxu0 %v560
    %v596 = vpop.f32.mrb[0].mxu0
    %v597 = vadd.f32 0.0, %v596
    %v598 = vpop.f32.mrb[0].mxu0
    %v599 = vpop.f32.mrb[0].mxu0
    %v600 = vadd.f32 0.0, %v599
    %v601 = vpop.f32.mrb[0].mxu0
    %602 = vdwg.mxu0
    %v603 = vld [vmem:[%s3] sm:$0x3]
    %v604 = vunpack.c.l.s8.bf16 %v603
    %v605 = vpack.c.bf16 %v600, %v597
    %vm606 = vcmask 130048
    %v608 = vsel %vm606, %v604, 0
    %610 = vmatprep.subr.bf16.mxu0 0
    %611 = vmatpush1.bf16.msra.mxu0 %v605
    %612 = vmatprep.subr.bf16.mxu0 0
    %613 = vmatpush1.bf16.msra.mxu0 0
    %614 = vmatprep.subr.bf16.mxu0 0
    %615 = vmatpush1.bf16.msra.mxu0 0
    %616 = vmatprep.subr.bf16.mxu0 0
    %617 = vmatpush1.bf16.msra.mxu0 0
    %618 = vmatprep.subr.bf16.mxu0 0
    %619 = vmatpush1.bf16.msra.mxu0 0
    %620 = vmatprep.subr.bf16.mxu0 0
    %621 = vmatpush1.bf16.msra.mxu0 0
    %622 = vmatprep.subr.bf16.mxu0 0
    %623 = vmatpush1.bf16.msra.mxu0 0
    %624 = vmatprep.subr.bf16.mxu0 0
    %625 = vmatpush1.bf16.msra.mxu0 0
    %626 = vmatprep.subr.bf16.mxu0 0
    %627 = vmatpush1.bf16.msra.mxu0 0
    %628 = vmatprep.subr.bf16.mxu0 0
    %629 = vmatpush1.bf16.msra.mxu0 0
    %630 = vmatprep.subr.bf16.mxu0 0
    %631 = vmatpush1.bf16.msra.mxu0 0
    %632 = vmatprep.subr.bf16.mxu0 0
    %633 = vmatpush1.bf16.msra.mxu0 0
    %634 = vmatprep.subr.bf16.mxu0 0
    %635 = vmatpush1.bf16.msra.mxu0 0
    %636 = vmatprep.subr.bf16.mxu0 0
    %637 = vmatpush1.bf16.msra.mxu0 0
    %638 = vmatprep.subr.bf16.mxu0 0
    %639 = vmatpush1.bf16.msra.mxu0 0
    %640 = vmatprep.subr.bf16.mxu0 0
    %641 = vmatpush1.bf16.msra.mxu0 0
    %642 = vmatprep.mubr.bf16.mxu0 0
    %643 = vmatmul.mubr.bf16.gmra.mrb[0].mxu0 %v608
    %v644 = vpop.f32.mrb[0].mxu0
    %v645 = vadd.f32 0.0, %v644
    %v646 = vpop.f32.mrb[0].mxu0
    %v647 = vpop.f32.mrb[0].mxu0
    %v648 = vpop.f32.mrb[0].mxu0
    %649 = vdwg.mxu0
    %v650 = vld [vmem:[%s6] sm:$0xff]
    %652 = vset.pattern.permute.xlu0 0
    %653 = vperm.xlu0 %652, %v650
    %v654 = vpop.permute.xlu0 %653
    %v656 = vmul.f32 %v645, %v654
    %v657 = vld [vmem:[%s9] sm:$0xf]
    %v658 = vld [vmem:[%s9 + $0x4] sm:$0xf]
    %v659 = vld [vmem:[%s9 + $0x8] sm:$0xf]
    %v660 = vld [vmem:[%s9 + $0xc] sm:$0xf]
    %v665 = vunpack.c.l.b16 %v657
    %v666 = vunpack.c.l.b16 %v658
    %v667 = vunpack.c.l.b16 %v659
    %v668 = vunpack.c.l.b16 %v660
    %v669 = vpack.c.b16 %v666, %v665
    %v670 = vpack.c.b16 %v668, %v667
    %673 = vmatprep.subr.bf16.mxu0 0
    %674 = vmatpush1.bf16.msra.mxu0 %v669
    %675 = vmatprep.subr.bf16.mxu0 0
    %676 = vmatpush1.bf16.msra.mxu0 %v670
    %677 = vmatprep.subr.bf16.mxu0 0
    %678 = vmatpush1.bf16.msra.mxu0 0
    %679 = vmatprep.subr.bf16.mxu0 0
    %680 = vmatpush1.bf16.msra.mxu0 0
    %681 = vmatprep.subr.bf16.mxu0 0
    %682 = vmatpush1.bf16.msra.mxu0 0
    %683 = vmatprep.subr.bf16.mxu0 0
    %684 = vmatpush1.bf16.msra.mxu0 0
    %685 = vmatprep.subr.bf16.mxu0 0
    %686 = vmatpush1.bf16.msra.mxu0 0
    %687 = vmatprep.subr.bf16.mxu0 0
    %688 = vmatpush1.bf16.msra.mxu0 0
    %689 = vmatprep.subr.bf16.mxu0 0
    %690 = vmatpush1.bf16.msra.mxu0 0
    %691 = vmatprep.subr.bf16.mxu0 0
    %692 = vmatpush1.bf16.msra.mxu0 0
    %693 = vmatprep.subr.bf16.mxu0 0
    %694 = vmatpush1.bf16.msra.mxu0 0
    %695 = vmatprep.subr.bf16.mxu0 0
    %696 = vmatpush1.bf16.msra.mxu0 0
    %697 = vmatprep.subr.bf16.mxu0 0
    %698 = vmatpush1.bf16.msra.mxu0 0
    %699 = vmatprep.subr.bf16.mxu0 0
    %700 = vmatpush1.bf16.msra.mxu0 0
    %701 = vmatprep.subr.bf16.mxu0 0
    %702 = vmatpush1.bf16.msra.mxu0 0
    %703 = vmatprep.subr.bf16.mxu0 0
    %704 = vmatpush1.bf16.msra.mxu0 0
    %705 = vmatprep.mubr.bf16.mxu0 0
    %706 = vmatmul.mubr.bf16.gmra.mrb[0].mxu0 %v560
    %v707 = vpop.f32.mrb[0].mxu0
    %v708 = vadd.f32 %v656, %v707
    %v709 = vpop.f32.mrb[0].mxu0
    %v710 = vpop.f32.mrb[0].mxu0
    %v711 = vpop.f32.mrb[0].mxu0
    %712 = vdwg.mxu0
    %v713 = vld [vmem:[%s15] sm:$0x1]
    %v715 = vlaneseq
    %v716 = vshrl.u32 %v715, 7
    %v717 = vsub.s32 0, %v716
    %v718 = vrot.slane %v713, %v717
    %v720 = vadd.f32 %v708, %v718
    %721 = vst.msk [vmem:[#allocation2] sm:$0xff] %vm606, %v720
    // Predicated region
    $region66: #{tpu_custom_call.1} parent=1 // pred_check
      _
    $region67: #{tpu_custom_call.1} parent=1 // pred_check_branch
      %723 = sbr.rel (0) target = $region69
    $region68: #{tpu_custom_call.1} parent=1 // pred_region
      %s725 = ssub.s32 128, 128
      %726 = vsyncadd [#allocation3], %s725
      %s728 = sshll.u32 [#allocation2], 4
      %s729 = int_to_ptr.vmem [resolvable:$true] %s728
      %731 = dma.vmem_to_hbm [thread:$0]  %s729, 128, %s16, [#allocation3]
    $region69: #{tpu_custom_call.1} parent=1 // pred_fallthru
      _
    // Predicated region
    $region70: #{tpu_custom_call.1} parent=1 // pred_check
      _
    $region71: #{tpu_custom_call.1} parent=1 // pred_check_branch
      %733 = sbr.rel (0) target = $region73
    $region72: #{tpu_custom_call.1} parent=1 // pred_region
      %734 = dma.done [#allocation3], 128
    $region73: #{tpu_custom_call.1} parent=1 // pred_fallthru
      _
    %735 = vsyncpa [#allocation3], 1

</llo_original>
